<compile_context>
chip_gen: v7x
topology: tpu7x:2x2x1
jax: 0.10.0
libtpu: 0.0.40
codegen_flags: <defaults>
</compile_context>

<pallas_src>
import math

import jax
import jax.numpy as jnp
from jax.experimental import pallas as pl
from jax.experimental.pallas import tpu as pltpu


def make_sinusoidal_pe(d_model: int, max_seq_length: int = 5000,
                       dtype=jnp.float32) -> jnp.ndarray:
    """Builds the (max_seq_length, d_model) sinusoidal PE buffer (PyTorch semantics,
    including odd d_model where the cos half gets one fewer column). Build it once in
    the model dtype so the forward path never pays a full-buffer cast."""
    position = jnp.arange(max_seq_length, dtype=jnp.float32)[:, None]            # (L, 1)
    div_term = jnp.exp(
        jnp.arange(0, d_model, 2, dtype=jnp.float32) * (-math.log(10000.0) / d_model)
    )                                                                             # (ceil(d/2),)
    angles = position * div_term                                                  # (L, ceil(d/2))
    pe = jnp.zeros((max_seq_length, d_model), dtype=jnp.float32)
    pe = pe.at[:, 0::2].set(jnp.sin(angles))
    pe = pe.at[:, 1::2].set(jnp.cos(angles)[:, : d_model // 2])
    return pe.astype(dtype)


def _add_pe_kernel(x_ref, pe_ref, o_ref):
    # x_ref / o_ref: (1, TR, C) tile of one batch element; pe_ref: (TR, C), shared
    # across the batch (broadcast add on the VPU; purely HBM-bandwidth-bound).
    o_ref[...] = x_ref[...] + pe_ref[...]


def _best_128_divisor(n: int, max_lanes: int) -> int:
    """Largest multiple of 128 that divides n and is <= max_lanes (0 if none)."""
    best = 0
    k = 128
    while k <= min(n, max_lanes):
        if n % k == 0:
            best = k
        k += 128
    return best


def _choose_fold(L: int, D: int, max_L: int, max_lanes: int):
    """Pick the folded lane width C for (L, D) -> (R, C).

    Returns (C, slice_pe):
      * D % 128 == 0            -> identity fold, no slice.
      * 128-multiple divides gcd(L*D, max_L*D) -> fold both x and the full pe buffer.
      * else slice pe[:L] once (tiny copy) so C only has to divide L*D  -> lane-dense.
      * else give up: C = D (lane-sparse masked stores, still correct).
    """
    if D % 128 == 0:
        return D, False
    c = _best_128_divisor(math.gcd(L * D, max_L * D), max_lanes)
    if c:
        return c, False
    c = _best_128_divisor(L * D, max_lanes)
    if c:
        return c, True
    return D, False


def _pick_row_tile(R: int, target_rows: int) -> int:
    """Largest multiple-of-8 divisor of R near target_rows (no ragged last tile);
    only falls back to a ragged multiple-of-8 tile if no reasonable divisor exists."""
    target_rows = max(8, min(R, target_rows))
    best = 0
    tr = 8
    while tr <= target_rows:
        if R % tr == 0:
            best = tr
        tr += 8
    if best * 2 >= target_rows:
        return best
    return max(best, (target_rows // 8) * 8)


def _auto_budgets(target_block_bytes):
    """Generation-aware (block_bytes, vmem_limit_bytes)."""
    cap = None
    try:
        cap = getattr(pltpu.get_tpu_info(), "vmem_capacity_bytes", None)
    except Exception:
        cap = None
    if cap is not None and cap >= 96 * 1024 * 1024:
        # v5e / v6e: 128 MiB physical VMEM -> big slabs, fewer grid steps.
        vmem_limit = 64 * 1024 * 1024
        block_bytes = target_block_bytes or 8 * 1024 * 1024
    else:
        # v7x (64 MiB per TC) or unknown: conservative, but still >= 4 MiB blocks so
        # the ~0.35 us per-step overhead stays small vs 3.2 TB/s HBM.
        vmem_limit = 48 * 1024 * 1024
        block_bytes = target_block_bytes or 4 * 1024 * 1024
    # 2 inputs + 1 output, double buffered -> ~6x block bytes resident; keep headroom.
    block_bytes = min(block_bytes, vmem_limit // 8)
    return block_bytes, vmem_limit


def positional_encoding_forward(
    x: jnp.ndarray,
    pe: jnp.ndarray,
    *,
    target_block_bytes: int | None = None,   # None -> auto (4 MiB v7x / 8 MiB v5e,v6e)
    max_lanes: int = 1024,
    donate_x: bool = False,                  # alias x buffer as the output (in-place add)
) -> jnp.ndarray:
    """x: (B, L, d_model); pe: (max_seq_length, d_model). Returns x + pe[:L]."""
    B, L, D = x.shape
    max_L, D_pe = pe.shape
    if D_pe != D:
        raise ValueError(f"pe d_model {D_pe} != x d_model {D}")
    if L > max_L:
        raise ValueError(f"sequence length {L} exceeds max_seq_length {max_L}")

    # Build pe in the model dtype (make_sinusoidal_pe(dtype=...)) so this cast is a
    # no-op on the hot path. If it does fire, the add runs in x.dtype (<=1 bf16 ulp
    # deviation from PyTorch's f32-promote-then-downcast).
    if pe.dtype != x.dtype:
        pe = pe.astype(x.dtype)
    itemsize = jnp.dtype(x.dtype).itemsize

    block_bytes, vmem_limit = _auto_budgets(target_block_bytes)

    # Fold (L, D) -> (R, C) so the last (lane) dim is a multiple of 128 whenever
    # possible (full vst instead of masked vst.msk).
    C, slice_pe = _choose_fold(L, D, max_L, max_lanes)
    R = (L * D) // C
    x_f = x if (C == D and R == L) else x.reshape(B, R, C)
    if slice_pe:
        pe_f = pe[:L].reshape(R, C)            # one-time tiny copy; enables lane-dense fold
    elif C == D:
        pe_f = pe                              # window into the full buffer, no copy
    else:
        pe_f = pe.reshape((max_L * D) // C, C) # pure reshape of the full buffer

    io_alias = {0: 0} if donate_x else {}

    if R < 8:
        # Tiny problem: one (R, C) slab per batch element; every block equals its full
        # array so the (8,128) tiling rule is satisfied. The pe slice here is < a few KiB.
        pe_blk = pe_f[:R]
        grid = (B,)
        in_specs = [
            pl.BlockSpec((1, R, C), lambda b: (b, 0, 0)),
            pl.BlockSpec((R, C), lambda b: (0, 0)),
        ]
        out_specs = pl.BlockSpec((1, R, C), lambda b: (b, 0, 0))
        dims = ("parallel",)
        operands = (x_f, pe_blk)
    else:
        # Main path: row-tile to ~block_bytes. Grid is (row_tiles, B) with batch
        # innermost: the pe block index depends only on the row tile, so each pe tile
        # is DMA'd once per row tile and reused across the whole batch.
        TR = _pick_row_tile(R, block_bytes // (C * itemsize))
        row_tiles = pl.cdiv(R, TR)
        # v7x megacore: make sure there are at least 2 units of parallel work.
        if row_tiles * B < 2 and R >= 16 and (R // 2) % 8 == 0:
            TR = R // 2
            row_tiles = 2
        grid = (row_tiles, B)
        in_specs = [
            pl.BlockSpec((1, TR, C), lambda r, b: (b, r, 0)),
            pl.BlockSpec((TR, C), lambda r, b: (r, 0)),
        ]
        out_specs = pl.BlockSpec((1, TR, C), lambda r, b: (b, r, 0))
        dims = ("parallel", "parallel")        # both independent -> v7x megacore shards
        operands = (x_f, pe_f)

    out = pl.pallas_call(
        _add_pe_kernel,
        out_shape=jax.ShapeDtypeStruct((B, R, C), x.dtype),
        grid=grid,
        in_specs=in_specs,
        out_specs=out_specs,
        input_output_aliases=io_alias,
        compiler_params=pltpu.CompilerParams(
            dimension_semantics=dims,
            vmem_limit_bytes=vmem_limit,
        ),
    )(*operands)

    return out.reshape(B, L, D)


if __name__ == "__main__":
    key = jax.random.PRNGKey(0)
    # (B, L, d_model, max_seq_length, dtype, forced target_block_bytes)
    cases = [
        (2, 8, 32, 64, jnp.float32, None),          # tiny folded path (R < 8)
        (2, 64, 128, 128, jnp.float32, None),        # lane-aligned, L == max_seq_length
        (2, 40, 96, 100, jnp.float32, None),         # gcd fold fails -> pe[:L]-slice fold
        (2, 256, 32, 512, jnp.float32, None),        # folded to 1024-lane rows, main path
        (2, 64, 128, 256, jnp.float32, 16 * 128 * 4),  # forced multi row-tile grid (4, 2)
        (2, 48, 128, 128, jnp.bfloat16, None),       # bf16: pe built in bf16, no cast pass
    ]
    for idx, (B, L, D, max_L, dt, tbb) in enumerate(cases):
        key, sub = jax.random.split(key)
        x = jax.random.normal(sub, (B, L, D), dtype=jnp.float32).astype(dt)
        pe = make_sinusoidal_pe(D, max_L, dtype=dt)

        out = jax.block_until_ready(
            positional_encoding_forward(x, pe, target_block_bytes=tbb)
        )

        ref = (x.astype(jnp.float32) + pe.astype(jnp.float32)[None, :L, :])
        assert out.shape == (B, L, D), f"bad shape in case {idx}"
        tol = 2e-2 if dt == jnp.bfloat16 else 1e-6
        assert jnp.allclose(out.astype(jnp.float32), ref, atol=tol, rtol=tol), (
            f"mismatch in case {idx}"
        )

    print("KERNEL_OK")
</pallas_src>

<mosaic_0001>
module attributes {stable_mosaic.version = 11 : i64} {
  func.func @_add_pe_kernel(%arg0: i32, %arg1: memref<1x1x256xf32, #tpu.memory_space<vmem>>, %arg2: memref<1x256xf32, #tpu.memory_space<vmem>>, %arg3: memref<1x1x256xf32, #tpu.memory_space<vmem>>) attributes {dimension_semantics = [#tpu.dimension_semantics<parallel>], iteration_bounds = array<i64: 2>, scalar_prefetch = 0 : i64, scratch_operands = 0 : i64, tpu.core_type = #tpu.core_type<tc>, window_params = [{transform_indices = @transform_0, window_bounds = array<i64: 1, 1, 256>}, {pipeline_mode = #tpu.pipeline_mode<synchronous>, transform_indices = @transform_1, window_bounds = array<i64: 1, 256>}, {transform_indices = @transform_2, window_bounds = array<i64: 1, 1, 256>}]} {
    %c0 = arith.constant 0 : index
    %c0_0 = arith.constant 0 : index
    %c0_1 = arith.constant 0 : index
    %0 = vector.load %arg1[%c0, %c0_0, %c0_1] : memref<1x1x256xf32, #tpu.memory_space<vmem>>, vector<1x1x256xf32>
    %c0_2 = arith.constant 0 : index
    %c0_3 = arith.constant 0 : index
    %1 = vector.load %arg2[%c0_2, %c0_3] : memref<1x256xf32, #tpu.memory_space<vmem>>, vector<1x256xf32>
    %2 = vector.shape_cast %1 : vector<1x256xf32> to vector<1x1x256xf32>
    %3 = arith.addf %0, %2 : vector<1x1x256xf32>
    %c0_4 = arith.constant 0 : index
    %c0_5 = arith.constant 0 : index
    %c0_6 = arith.constant 0 : index
    %4 = vector.load %arg3[%c0_4, %c0_5, %c0_6] : memref<1x1x256xf32, #tpu.memory_space<vmem>>, vector<1x1x256xf32>
    tpu.vector_store %arg3[%c0_4, %c0_5, %c0_6], %3 {strides = array<i32>} : memref<1x1x256xf32, #tpu.memory_space<vmem>>, vector<1x1x256xf32>,
    return
  }
  func.func @transform_0(%arg0: i32) -> (i32, i32, i32) {
    %c0_i32 = arith.constant 0 : i32
    %c0_i32_0 = arith.constant 0 : i32
    %c0_i32_1 = arith.constant 0 : i32
    return %arg0, %c0_i32, %c0_i32_0 : i32, i32, i32
  }
  func.func @transform_1(%arg0: i32) -> (i32, i32) {
    %c0_i32 = arith.constant 0 : i32
    %c0_i32_0 = arith.constant 0 : i32
    %c0_i32_1 = arith.constant 0 : i32
    return %c0_i32, %c0_i32_0 : i32, i32
  }
  func.func @transform_2(%arg0: i32) -> (i32, i32, i32) {
    %c0_i32 = arith.constant 0 : i32
    %c0_i32_0 = arith.constant 0 : i32
    %c0_i32_1 = arith.constant 0 : i32
    return %arg0, %c0_i32, %c0_i32_0 : i32, i32, i32
  }
}

</mosaic_0001>

<llo_original>
// kernel: tpu_custom_call.1
$region0: #{tpu_custom_call.1}
  #allocation0 [shape = 'u32[]', space=smem, size = 0x4, offset = 0x4, fixed_abs, tag = 'smem constant byte address 0x4 - core index']
  #allocation1 [shape = 'u32[144,128]{1,0:T(1,128)}', space=vmem, size = 0x12000, scoped, tag = 'internal scratch']
  %s0 = inlined_call_operand.hbm [shape: f32[2,1,256], index: 0, kind: input, shape index: {}]
  %s1 = inlined_call_operand.vmem [shape: f32[1,256], index: 1, kind: input, shape index: {}]
  %s2 = inlined_call_operand.hbm [shape: f32[2,1,256], index: 2, kind: output, shape index: {}]
  %s3 = sld [smem:[#allocation0]]
  $region45: #{tpu_custom_call.1} parent=0
    _
  %s5 = ssub.s32 1, %s3
  %s6 = scalar_select 0, %s5, %s3
  $region1: #{tpu_custom_call.1} parent=0
    #allocation2 [shape = 'u8[2048]{0}', space=vmem, size = 0x800, scoped, tag = 'input window, operand 0']
    #allocation3 [shape = 's32[2]{0}', space=sflag, size = 0x8, scoped, tag = 'scoped memory for tpu_custom_call.1']
    #allocation4 [shape = 's32[2]{0}', space=sflag, size = 0x8, scoped, tag = 'scoped memory for tpu_custom_call.1']
    #allocation5 [shape = 'u8[2048]{0}', space=vmem, size = 0x800, scoped, tag = 'output window, operand 0']
    %7 = vsyncpa [#allocation3], 0
    %s8 = scalar_lea.sflag [#allocation3], 1
    %9 = vsyncpa %s8, 0
    %10 = vsyncpa [#allocation4], 0
    %s11 = scalar_lea.sflag [#allocation4], 1
    %12 = vsyncpa %s11, 0
    loop: start=0, step=1, limit=4
    $region2: #{tpu_custom_call.1} parent=1 // loop_pre_header
      _
    $region3: #{tpu_custom_call.1} parent=1 // loop_header
      %s14 = sphi 0, %s18
      %p15 = scmp.ge.s32.totalorder %s14, 4
      %s24 = sphi 0, %s26
      %s27 = sphi 0, %s24
      %s28 = sphi 0, %s27
      %s44 = sphi 0, %s28
      %s48 = sphi 0, %s48
      %s50 = sphi 0, %s48
      %s51 = sphi 0, %s50
      %s65 = sphi 0, %s51
      %s71 = sphi 0, %s73
      %s74 = sphi 0, %s71
      %s75 = sphi 0, %s74
      %s91 = sphi 0, %s75
    $region4: #{tpu_custom_call.1} parent=1 // loop_header_branch
      %17 = sbr.rel (%p15) target = $region8
    $region5: #{tpu_custom_call.1} parent=1 // loop_body
      %s19 = ssub.s32 %s14, 1
      %s20 = ssub.s32 %s14, 2
      %s21 = sadd.s32 %s14, 1
      %s22 = ssub.s32 %s14, %s21
      %p23 = scmp.eq.s32.totalorder %s22, 0
      %s25 = sadd.s32 %s24, 1
      %s26 = scalar_select %p23, %s24, %s25
      %p29 = pneg %p23
      %p30 = scmp.eq.s32.totalorder %s14, 1
      %p31 = por %p29, %p30
      %p32 = scmp.ne.s32.totalorder %s24, %s27
      %p33 = scmp.eq.s32.totalorder %s14, 0
      %p34 = por %p32, %p33
      %p35 = scmp.ne.s32.totalorder %s24, %s27
      %p36 = scmp.eq.s32.totalorder %s19, 1
      %p37 = por %p35, %p36
      %p38 = scmp.ne.s32.totalorder %s27, %s28
      %p39 = scmp.eq.s32.totalorder %s19, 0
      %p40 = por %p38, %p39
      %p41 = scmp.ne.s32.totalorder %s27, %s28
      %p42 = scmp.eq.s32.totalorder %s20, 1
      %p43 = por %p41, %p42
      %p45 = scmp.ne.s32.totalorder %s28, %s44
      %p46 = scmp.eq.s32.totalorder %s20, 0
      %p47 = por %p45, %p46
      %s49 = sadd.s32 %s48, 1
      %p52 = scmp.eq.s32.totalorder %s14, 1
      %p53 = scmp.ne.s32.totalorder %s48, %s50
      %p54 = scmp.eq.s32.totalorder %s14, 0
      %p55 = por %p53, %p54
      %p56 = scmp.ne.s32.totalorder %s48, %s50
      %p57 = scmp.eq.s32.totalorder %s19, 1
      %p58 = por %p56, %p57
      %p59 = scmp.ne.s32.totalorder %s50, %s51
      %p60 = scmp.eq.s32.totalorder %s19, 0
      %p61 = por %p59, %p60
      %p62 = scmp.ne.s32.totalorder %s50, %s51
      %p63 = scmp.eq.s32.totalorder %s20, 1
      %p64 = por %p62, %p63
      %p66 = scmp.ne.s32.totalorder %s51, %s65
      %p67 = scmp.eq.s32.totalorder %s20, 0
      %p68 = por %p66, %p67
      %s69 = ssub.s32 %s14, %s21
      %p70 = scmp.eq.s32.totalorder %s69, 0
      %s72 = sadd.s32 %s71, 1
      %s73 = scalar_select %p70, %s71, %s72
      %p76 = pneg %p70
      %p77 = scmp.eq.s32.totalorder %s14, 1
      %p78 = por %p76, %p77
      %p79 = scmp.ne.s32.totalorder %s71, %s74
      %p80 = scmp.eq.s32.totalorder %s14, 0
      %p81 = por %p79, %p80
      %p82 = scmp.ne.s32.totalorder %s71, %s74
      %p83 = scmp.eq.s32.totalorder %s19, 1
      %p84 = por %p82, %p83
      %p85 = scmp.ne.s32.totalorder %s74, %s75
      %p86 = scmp.eq.s32.totalorder %s19, 0
      %p87 = por %p85, %p86
      %p88 = scmp.ne.s32.totalorder %s74, %s75
      %p89 = scmp.eq.s32.totalorder %s20, 1
      %p90 = por %p88, %p89
      %p92 = scmp.ne.s32.totalorder %s75, %s91
      %p93 = scmp.eq.s32.totalorder %s20, 0
      %p94 = por %p92, %p93
      %p95 = scmp.le.s32.totalorder 1, %s14
      %p96 = scmp.lt.s32.totalorder %s14, 3
      %p97 = pnand %p95, %p96
      %p98 = pneg %p97
      // Predicated region
      $region9: #{tpu_custom_call.1} parent=5 // pred_check
        _
      $region10: #{tpu_custom_call.1} parent=5 // pred_check_branch
        %100 = sbr.rel (%p97) target = $region12
      $region11: #{tpu_custom_call.1} parent=5 // pred_region
        %s101 = ssub.s32 %s14, 1
        // Predicated region
        $region13: #{tpu_custom_call.1} parent=11 // pred_check
          %p102 = pneg %p61
        $region14: #{tpu_custom_call.1} parent=11 // pred_check_branch
          %104 = sbr.rel (%p102) target = $region16
        $region15: #{tpu_custom_call.1} parent=11 // pred_region
          _
        $region16: #{tpu_custom_call.1} parent=11 // pred_fallthru
          _
      $region12: #{tpu_custom_call.1} parent=5 // pred_fallthru
        _
      %p105 = scmp.lt.s32.totalorder %s14, 2
      // Predicated region
      $region17: #{tpu_custom_call.1} parent=5 // pred_check
        %p106 = pneg %p105
      $region18: #{tpu_custom_call.1} parent=5 // pred_check_branch
        %108 = sbr.rel (%p106) target = $region20
      $region19: #{tpu_custom_call.1} parent=5 // pred_region
        // Predicated region
        $region21: #{tpu_custom_call.1} parent=19 // pred_check
          %p109 = pneg %p34
        $region22: #{tpu_custom_call.1} parent=19 // pred_check_branch
          %111 = sbr.rel (%p109) target = $region24
        $region23: #{tpu_custom_call.1} parent=19 // pred_region
          %s112 = sand.u32 %s24, 1
          %s113 = scalar_lea.sflag [#allocation3], %s112
          %s114 = sand.u32 %s24, 1
          %s115 = smul.addr %s114, 2
          %s116 = scalar_lea.vmem [#allocation2], %s115
          %s118 = ssub.s32 32, 32
          %119 = vsyncadd %s113, %s118
          %s120 = smul.addr %s14, 2
          %s121 = smul.addr %s120, 16
          %s122 = scalar_lea.hbm %s0, %s121
          %s124 = sshll.u32 %s116, 4
          %s125 = int_to_ptr.vmem [resolvable:$true] %s124
          %127 = dma.hbm_to_vmem [thread:$0]  %s122, 32, %s125, %s113
        $region24: #{tpu_custom_call.1} parent=19 // pred_fallthru
          _
      $region20: #{tpu_custom_call.1} parent=5 // pred_fallthru
        _
      %p128 = scmp.le.s32.totalorder 1, %s14
      %p129 = scmp.lt.s32.totalorder %s14, 3
      %p130 = pnand %p128, %p129
      %p131 = pneg %p130
      // Predicated region
      $region25: #{tpu_custom_call.1} parent=5 // pred_check
        _
      $region26: #{tpu_custom_call.1} parent=5 // pred_check_branch
        %133 = sbr.rel (%p130) target = $region28
      $region27: #{tpu_custom_call.1} parent=5 // pred_region
        %s134 = ssub.s32 %s14, 1
        %s135 = sand.u32 %s27, 1
        %s136 = scalar_lea.sflag [#allocation3], %s135
        %s137 = sand.u32 %s27, 1
        %s138 = smul.addr %s137, 2
        %s139 = scalar_lea.vmem [#allocation2], %s138
        // Predicated region
        $region29: #{tpu_custom_call.1} parent=27 // pred_check
          %p140 = pneg %p40
        $region30: #{tpu_custom_call.1} parent=27 // pred_check_branch
          %142 = sbr.rel (%p140) target = $region32
        $region31: #{tpu_custom_call.1} parent=27 // pred_region
          %143 = dma.done %s136, 32
        $region32: #{tpu_custom_call.1} parent=27 // pred_fallthru
          _
        %s144 = sand.u32 %s27, 1
        %s145 = scalar_lea.sflag [#allocation3], %s144
        %s146 = sand.u32 %s27, 1
        %s147 = smul.addr %s146, 2
        %s148 = scalar_lea.vmem [#allocation2], %s147
        %p149 = pneg %p40
        %p150 = pneg %p37
        %p151 = pneg %p61
        %p152 = pneg %p58
        %p153 = pneg %p87
        %p154 = pneg %p84
        %s155 = sand.u32 %s74, 1
        %s156 = scalar_lea.sflag [#allocation4], %s155
        %s157 = sand.u32 %s74, 1
        %s158 = smul.addr %s157, 2
        %s159 = scalar_lea.vmem [#allocation5], %s158
        %v160 = vld [vmem:[%s139] sm:$0x3]
        %v161 = vld [vmem:[%s1] sm:$0x3]
        %v162 = vadd.f32 %v160, %v161
        %v163 = vlaneseq
        %vm164 = vcmp.ge.s32.totalorder %v163, 0
        %vm165 = vcmp.lt.s32.totalorder %v163, 256
        %vm166 = vmand %vm164, %vm165
        %167 = vst.msk [vmem:[%s159] sm:$0x3] %vm166, %v162
        %s168 = sand.u32 %s74, 1
        %s169 = scalar_lea.sflag [#allocation4], %s168
        %s170 = sand.u32 %s74, 1
        %s171 = smul.addr %s170, 2
        %s172 = scalar_lea.vmem [#allocation5], %s171
        // Predicated region
        $region33: #{tpu_custom_call.1} parent=27 // pred_check
          %p173 = pneg %p84
        $region34: #{tpu_custom_call.1} parent=27 // pred_check_branch
          %175 = sbr.rel (%p173) target = $region36
        $region35: #{tpu_custom_call.1} parent=27 // pred_region
          %s177 = ssub.s32 32, 32
          %178 = vsyncadd %s169, %s177
          %s179 = smul.addr %s19, 2
          %s180 = smul.addr %s179, 16
          %s181 = scalar_lea.hbm %s2, %s180
          %s183 = sshll.u32 %s172, 4
          %s184 = int_to_ptr.vmem [resolvable:$true] %s183
          %186 = dma.vmem_to_hbm [thread:$0]  %s184, 32, %s181, %s169
        $region36: #{tpu_custom_call.1} parent=27 // pred_fallthru
          _
      $region28: #{tpu_custom_call.1} parent=5 // pred_fallthru
        _
      %p187 = scmp.le.s32.totalorder 2, %s14
      // Predicated region
      $region37: #{tpu_custom_call.1} parent=5 // pred_check
        %p188 = pneg %p187
      $region38: #{tpu_custom_call.1} parent=5 // pred_check_branch
        %190 = sbr.rel (%p188) target = $region40
      $region39: #{tpu_custom_call.1} parent=5 // pred_region
        %s191 = ssub.s32 %s14, 2
        // Predicated region
        $region41: #{tpu_custom_call.1} parent=39 // pred_check
          %p192 = pneg %p90
        $region42: #{tpu_custom_call.1} parent=39 // pred_check_branch
          %194 = sbr.rel (%p192) target = $region44
        $region43: #{tpu_custom_call.1} parent=39 // pred_region
          %s195 = sand.u32 %s75, 1
          %s196 = scalar_lea.sflag [#allocation4], %s195
          %s197 = sand.u32 %s75, 1
          %s198 = smul.addr %s197, 2
          %s199 = scalar_lea.vmem [#allocation5], %s198
          %200 = dma.done %s196, 32
        $region44: #{tpu_custom_call.1} parent=39 // pred_fallthru
          _
      $region40: #{tpu_custom_call.1} parent=5 // pred_fallthru
        _
    $region6: #{tpu_custom_call.1} parent=1 // loop_footer
      %s18 = sadd.s32 1, %s14
    $region7: #{tpu_custom_call.1} parent=1 // loop_footer_branch
      %13 = sbr.rel target = $region3
    $region8: #{tpu_custom_call.1} parent=1 // loop_exit
      _
    %201 = vsyncpa [#allocation3], 1
    %s202 = scalar_lea.sflag [#allocation3], 1
    %203 = vsyncpa %s202, 1
    %204 = vsyncpa [#allocation4], 1
    %s205 = scalar_lea.sflag [#allocation4], 1
    %206 = vsyncpa %s205, 1

</llo_original>
